<compile_context>
chip_gen: v5e
topology: v5e:2x2
jax: 0.10.0
libtpu: 0.0.40
codegen_flags: <defaults>
</compile_context>

<pallas_src>
import functools

import jax
import jax.numpy as jnp
from jax.experimental import pallas as pl
from jax.experimental.pallas import tpu as pltpu

_LN_EPS = 1e-5


def _encoder_kernel(x_ref, w_ref, b_ref, gamma_ref, beta_ref, gmat_ref, o_ref):
    """Fused Linear + LayerNorm + ReLU on `pack` samples per sublane row.

    x_ref:               [R, pack*A]       packed inputs (samples side-by-side on lanes)
    w_ref:               [pack*A, pack*H]  block-diagonal weight kron(I_pack, W)
    b/gamma/beta_ref:    [1, pack*H]       lane-group-tiled vectors
    gmat_ref:            [pack*H, pack*H]  group-averaging matrix kron(I_pack, 11^T / H)
    o_ref:               [R, pack*H]       packed outputs (lane-dense when pack*H == 128)
    """
    # Linear (MXU, f32 accumulation). The block-diagonal weight keeps the
    # packed samples independent of each other.
    h = jnp.dot(x_ref[...], w_ref[...], preferred_element_type=jnp.float32)
    h = h + b_ref[...]

    # LayerNorm over each H-lane group. Group means / variances are computed
    # with MXU matmuls against the group-averaging matrix (idle-MXU slack),
    # avoiding XLU cross-lane reduces and any relayout before the store.
    gmat = gmat_ref[...]
    mean = jnp.dot(h, gmat, preferred_element_type=jnp.float32)
    d = h - mean
    # Centered variance: numerically safe (>= 0), matches the reference.
    var = jnp.dot(d * d, gmat, preferred_element_type=jnp.float32)
    inv_std = jax.lax.rsqrt(var + _LN_EPS)  # EUP

    y = d * inv_std * gamma_ref[...] + beta_ref[...]
    o_ref[...] = jnp.maximum(y, 0.0).astype(o_ref.dtype)  # ReLU, lane-dense store


def _choose_pack(batch, hidden):
    """Largest pack p with p*hidden <= 128, 128 % hidden == 0 and batch % p == 0,
    so both the input and output packed views are free reshapes."""
    if hidden <= 0 or 128 % hidden != 0:
        return 1
    p = 128 // hidden
    while p > 1 and batch % p != 0:
        p //= 2
    return max(p, 1)


def _pack_params(w, b, gamma, beta, pack):
    """Build the block-diagonal weight, group-averaging matrix and tiled vectors."""
    _, h_dim = w.shape
    dt = w.dtype
    eye = jnp.eye(pack, dtype=dt)
    w_p = jnp.kron(eye, w)                                              # [pack*A, pack*H]
    gmat = jnp.kron(eye, jnp.full((h_dim, h_dim), 1.0 / h_dim, dtype=dt))
    b_p = jnp.tile(b, pack).reshape(1, pack * h_dim)
    g_p = jnp.tile(gamma, pack).reshape(1, pack * h_dim)
    be_p = jnp.tile(beta, pack).reshape(1, pack * h_dim)
    return w_p, gmat, b_p, g_p, be_p


@functools.partial(jax.jit, static_argnames=("block_b", "gridless_max"))
def action_encoder(x, w, b, gamma, beta, *, block_b=4096, gridless_max=32768):
    """x: [B, A] f32; w: [A, H] (fc1.weight.T); b, gamma, beta: [H]. Returns [B, H]."""
    batch, a_dim = x.shape
    h_dim = w.shape[1]

    pack = _choose_pack(batch, h_dim)
    rows = batch // pack
    x_p = x.reshape(rows, pack * a_dim)          # free row-major view (bitcast)
    w_p, gmat, b_p, g_p, be_p = _pack_params(w, b, gamma, beta, pack)
    args = (x_p, w_p, b_p, g_p, be_p, gmat)
    out_struct = jax.ShapeDtypeStruct((rows, pack * h_dim), jnp.float32)

    # Advisory cost hint: the op is HBM/overhead bound (AI ~0.2 flop/byte at
    # the semantic flop count), keep XLA from mis-scheduling the custom call.
    cost = pl.CostEstimate(
        flops=2 * batch * a_dim * h_dim,
        transcendentals=batch,  # one rsqrt per sample
        bytes_accessed=4 * (batch * (a_dim + h_dim) + a_dim * h_dim + 3 * h_dim),
    )

    # VMEM bytes per packed row once resident (input + output, lane-padded to 128).
    def lane_bytes(n):
        return -(-n // 128) * 128 * 4

    per_row_vmem = lane_bytes(pack * a_dim) + lane_bytes(pack * h_dim)
    vmem_budget = 12 * 1024 * 1024  # headroom under v5e's 16 MiB scoped default

    # --- Gridless path: one invocation, everything resident in VMEM. -------
    if batch <= gridless_max and rows * per_row_vmem <= vmem_budget:
        vmem = pl.BlockSpec(memory_space=pltpu.MemorySpace.VMEM)
        out_p = pl.pallas_call(
            _encoder_kernel,
            out_shape=out_struct,
            in_specs=[vmem] * 6,
            out_specs=vmem,
            cost_estimate=cost,
        )(*args)
        return out_p.reshape(batch, h_dim)       # free view back to [B, H]

    # --- Tiled path: tile only the (packed) batch axis. --------------------
    # Params use constant index maps so they are DMA'd once and stay
    # VMEM-resident across grid steps. A ragged last block is handled by
    # Pallas boundary masking (no pad, no trailing slice). At the default
    # block_b the double-buffered tiles are ~2 MiB, fine on every generation
    # (incl. v7x's 64 MiB physical VMEM) without vmem_limit_bytes.
    row_block = max(8, ((block_b // pack) // 8) * 8)
    grid = (pl.cdiv(rows, row_block),)
    out_p = pl.pallas_call(
        _encoder_kernel,
        out_shape=out_struct,
        grid=grid,
        in_specs=[
            pl.BlockSpec((row_block, pack * a_dim), lambda i: (i, 0)),
            pl.BlockSpec((pack * a_dim, pack * h_dim), lambda i: (0, 0)),
            pl.BlockSpec((1, pack * h_dim), lambda i: (0, 0)),
            pl.BlockSpec((1, pack * h_dim), lambda i: (0, 0)),
            pl.BlockSpec((1, pack * h_dim), lambda i: (0, 0)),
            pl.BlockSpec((pack * h_dim, pack * h_dim), lambda i: (0, 0)),
        ],
        out_specs=pl.BlockSpec((row_block, pack * h_dim), lambda i: (i, 0)),
        compiler_params=pltpu.CompilerParams(
            # Independent batch tiles: shards across v7x's two TensorCores,
            # harmless on single-core v5e/v6e.
            # TODO(synk): use pltpu.CORE_PARALLEL here if a v7x trace shows
            # one TensorCore idle.
            dimension_semantics=("parallel",),
        ),
        cost_estimate=cost,
    )(*args)
    return out_p.reshape(batch, h_dim)


def reference(x, w, b, gamma, beta):
    h = x @ w + b
    mean = jnp.mean(h, axis=-1, keepdims=True)
    var = jnp.mean(jnp.square(h - mean), axis=-1, keepdims=True)
    normed = (h - mean) * jax.lax.rsqrt(var + _LN_EPS) * gamma + beta
    return jnp.maximum(normed, 0.0)


if __name__ == "__main__":
    key = jax.random.PRNGKey(0)
    action_dim, hidden_dim = 16, 32
    k_w, k_b, k_g, k_be, k_x1, k_x2, k_x3 = jax.random.split(key, 7)

    # fc1 weight stored transposed ([A, H]); non-trivial LayerNorm affine.
    w = jax.random.normal(k_w, (action_dim, hidden_dim), jnp.float32) * 0.1
    b = jax.random.normal(k_b, (hidden_dim,), jnp.float32) * 0.1
    gamma = 1.0 + 0.1 * jax.random.normal(k_g, (hidden_dim,), jnp.float32)
    beta = 0.1 * jax.random.normal(k_be, (hidden_dim,), jnp.float32)

    def check(x, name, **overrides):
        out = action_encoder(x, w, b, gamma, beta, **overrides)
        jax.block_until_ready(out)
        ref = reference(x, w, b, gamma, beta)
        assert out.shape == ref.shape, f"{name}: shape {out.shape} vs {ref.shape}"
        assert jnp.allclose(out, ref, atol=1e-4, rtol=1e-4), f"{name}: mismatch"

    # 1) Small batch, divisible by the pack factor -> lane-dense gridless path.
    check(jax.random.normal(k_x1, (8, action_dim), jnp.float32), "gridless/packed")

    # 2) Larger batch forced onto the tiled path (small overrides), with a
    #    ragged last block -> exercises the grid + Pallas boundary masking.
    check(jax.random.normal(k_x2, (1000, action_dim), jnp.float32),
          "tiled/packed/ragged", block_b=256, gridless_max=128)

    # 3) Batch not divisible by 2 or 4 -> unpacked (pack=1) fallback path.
    check(jax.random.normal(k_x3, (7, action_dim), jnp.float32), "gridless/unpacked")

    print("KERNEL_OK")
</pallas_src>

<mosaic_0001>
module attributes {stable_mosaic.version = 11 : i64} {
  func.func @_encoder_kernel(%arg0: memref<2x64xf32, #tpu.memory_space<vmem>>, %arg1: memref<64x128xf32, #tpu.memory_space<vmem>>, %arg2: memref<1x128xf32, #tpu.memory_space<vmem>>, %arg3: memref<1x128xf32, #tpu.memory_space<vmem>>, %arg4: memref<1x128xf32, #tpu.memory_space<vmem>>, %arg5: memref<128x128xf32, #tpu.memory_space<vmem>>, %arg6: memref<2x128xf32, #tpu.memory_space<vmem>>) attributes {dimension_semantics = [], scalar_prefetch = 0 : i64, scratch_operands = 0 : i64, tpu.core_type = #tpu.core_type<tc>} {
    %c0 = arith.constant 0 : index
    %c0_0 = arith.constant 0 : index
    %0 = vector.load %arg0[%c0, %c0_0] : memref<2x64xf32, #tpu.memory_space<vmem>>, vector<2x64xf32>
    %c0_1 = arith.constant 0 : index
    %c0_2 = arith.constant 0 : index
    %1 = vector.load %arg1[%c0_1, %c0_2] : memref<64x128xf32, #tpu.memory_space<vmem>>, vector<64x128xf32>
    %cst = arith.constant dense<0.000000e+00> : vector<2x128xf32>
    %2 = tpu.matmul %0, %1, %cst {dimension_numbers = #tpu.dot_dimension_numbers<[1], [0], [0], [1], [0, 0, 1, 1], [], []>} : vector<2x64xf32>, vector<64x128xf32>, vector<2x128xf32> -> vector<2x128xf32>
    %c0_3 = arith.constant 0 : index
    %c0_4 = arith.constant 0 : index
    %3 = vector.load %arg2[%c0_3, %c0_4] : memref<1x128xf32, #tpu.memory_space<vmem>>, vector<1x128xf32>
    %4 = vector.broadcast %3 : vector<1x128xf32> to vector<2x128xf32>
    %5 = arith.addf %2, %4 : vector<2x128xf32>
    %c0_5 = arith.constant 0 : index
    %c0_6 = arith.constant 0 : index
    %6 = vector.load %arg5[%c0_5, %c0_6] : memref<128x128xf32, #tpu.memory_space<vmem>>, vector<128x128xf32>
    %cst_7 = arith.constant dense<0.000000e+00> : vector<2x128xf32>
    %7 = tpu.matmul %5, %6, %cst_7 {dimension_numbers = #tpu.dot_dimension_numbers<[1], [0], [0], [1], [0, 0, 1, 1], [], []>} : vector<2x128xf32>, vector<128x128xf32>, vector<2x128xf32> -> vector<2x128xf32>
    %8 = arith.subf %5, %7 : vector<2x128xf32>
    %9 = arith.mulf %8, %8 : vector<2x128xf32>
    %cst_8 = arith.constant dense<0.000000e+00> : vector<2x128xf32>
    %10 = tpu.matmul %9, %6, %cst_8 {dimension_numbers = #tpu.dot_dimension_numbers<[1], [0], [0], [1], [0, 0, 1, 1], [], []>} : vector<2x128xf32>, vector<128x128xf32>, vector<2x128xf32> -> vector<2x128xf32>
    %cst_9 = arith.constant 9.99999974E-6 : f32
    %11 = vector.broadcast %cst_9 : f32 to vector<2x128xf32>
    %12 = arith.addf %10, %11 : vector<2x128xf32>
    %13 = math.rsqrt %12 : vector<2x128xf32>
    %14 = arith.mulf %8, %13 : vector<2x128xf32>
    %c0_10 = arith.constant 0 : index
    %c0_11 = arith.constant 0 : index
    %15 = vector.load %arg3[%c0_10, %c0_11] : memref<1x128xf32, #tpu.memory_space<vmem>>, vector<1x128xf32>
    %16 = vector.broadcast %15 : vector<1x128xf32> to vector<2x128xf32>
    %17 = arith.mulf %14, %16 : vector<2x128xf32>
    %c0_12 = arith.constant 0 : index
    %c0_13 = arith.constant 0 : index
    %18 = vector.load %arg4[%c0_12, %c0_13] : memref<1x128xf32, #tpu.memory_space<vmem>>, vector<1x128xf32>
    %19 = vector.broadcast %18 : vector<1x128xf32> to vector<2x128xf32>
    %20 = arith.addf %17, %19 : vector<2x128xf32>
    %cst_14 = arith.constant 0.000000e+00 : f32
    %21 = vector.broadcast %cst_14 : f32 to vector<2x128xf32>
    %22 = arith.maximumf %20, %21 : vector<2x128xf32>
    %c0_15 = arith.constant 0 : index
    %c0_16 = arith.constant 0 : index
    %23 = vector.load %arg6[%c0_15, %c0_16] : memref<2x128xf32, #tpu.memory_space<vmem>>, vector<2x128xf32>
    tpu.vector_store %arg6[%c0_15, %c0_16], %22 {strides = array<i32>} : memref<2x128xf32, #tpu.memory_space<vmem>>, vector<2x128xf32>,
    return
  }
}

</mosaic_0001>

<llo_original>
// kernel: tile.18
$region0: #{tile.18}
  #allocation0 [shape = 's32[1]{0}', space=sflag, size = 0x4, scoped, tag = 'scoped memory for tile.18']
  %s0 = inlined_call_operand.vmem [shape: f32[32], index: 0, kind: input, shape index: {}]
  %s1 = inlined_call_operand.vmem [shape: f32[4,32], index: 1, kind: output, shape index: {}]
  // Predicated region
  $region2: #{tile.18} parent=0 // pred_check
    _
  $region3: #{tile.18} parent=0 // pred_check_branch
    %3 = sbr.rel (0) target = $region5
  $region4: #{tile.18} parent=0 // pred_region
    _
  $region5: #{tile.18} parent=0 // pred_fallthru
    _
  %v4 = vld [vmem:[%s0] ss:$0 sm:$0xff]
  %5 = vst [vmem:[%s1] sm:$0xf] %v4

// kernel: tile.19
$region0: #{tile.19}
  %s0 = inlined_call_operand.vmem [shape: f32[4,32], index: 0, kind: input, shape index: {}]
  %s1 = inlined_call_operand.vmem [shape: f32[1,128], index: 1, kind: output, shape index: {}]
  $region1: #{tile.19} parent=0
    #allocation0 [shape = 'u8[4096]{0}', space=vmem, size = 0x1000, scoped, tag = 'scoped mem for output reshape']
    #allocation1 [shape = 'u8[4096]{0}', space=vmem, size = 0x1000, scoped, tag = 'scoped mem for input reshape']
    %s3 = ssub.s32 16, 1
    %v4 = vld [vmem:[%s0] sm:%s3]
    %5 = vst [vmem:[#allocation1] sm:%s3] %v4
    %v6 = vld [vmem:[#allocation1] sm:$0x1]
    %vm7 = vcmask 261120
    %8 = vst.msk [vmem:[#allocation0] sm:$0x1] %vm7, %v6
    %s9 = scalar_lea.vmem [#allocation1], 3
    %v10 = vld [vmem:[%s9] sm:$0x1]
    %11 = vrot.lane.b32.xlu0 %v10, 96
    %v12 = vpop.permute.xlu0 %11
    %vm13 = vcmask 1048320
    %14 = vst.msk [vmem:[#allocation0] sm:$0x1] %vm13, %v12
    %s15 = scalar_lea.vmem [#allocation1], 2
    %v16 = vld [vmem:[%s15] sm:$0x1]
    %17 = vrot.lane.b32.xlu0 %v16, 64
    %v18 = vpop.permute.xlu0 %17
    %vm19 = vcmask 785920
    %20 = vst.msk [vmem:[#allocation0] sm:$0x1] %vm19, %v18
    %s21 = scalar_lea.vmem [#allocation1], 1
    %v22 = vld [vmem:[%s21] sm:$0x1]
    %23 = vrot.lane.b32.xlu0 %v22, 32
    %v24 = vpop.permute.xlu0 %23
    %vm25 = vcmask 523520
    %26 = vst.msk [vmem:[#allocation0] sm:$0x1] %vm25, %v24
    %s28 = ssub.s32 2, 1
    %v29 = vld [vmem:[#allocation0] sm:%s28]
    %s31 = ssub.s32 2, 1
    %32 = vst [vmem:[%s1] sm:%s31] %v29

// kernel: action_encoder.1
$region0: #{action_encoder.1}
  #allocation0 [shape = 'u32[]', space=smem, size = 0x4, offset = 0x4, fixed_abs, tag = 'smem constant byte address 0x4 - core index']
  #allocation1 [shape = 'u32[72,128]{1,0:T(1,128)}', space=vmem, size = 0x9000, scoped, tag = 'internal scratch']
  %s0 = inlined_call_operand.vmem [shape: f32[2,64], index: 0, kind: input, shape index: {}]
  %s1 = inlined_call_operand.vmem [shape: f32[64,128], index: 1, kind: input, shape index: {}]
  %s2 = inlined_call_operand.vmem [shape: f32[1,128], index: 2, kind: input, shape index: {}]
  %s3 = inlined_call_operand.vmem [shape: f32[1,128], index: 3, kind: input, shape index: {}]
  %s4 = inlined_call_operand.vmem [shape: f32[1,128], index: 4, kind: input, shape index: {}]
  %s5 = inlined_call_operand.vmem [shape: f32[128,128], index: 5, kind: input, shape index: {}]
  %s6 = inlined_call_operand.vmem [shape: f32[2,128], index: 6, kind: output, shape index: {}]
  %s7 = sld [smem:[#allocation0]]
  $region34: #{action_encoder.1} parent=0
    _
  %s9 = ssub.s32 1, %s7
  %s10 = scalar_select 0, %s9, %s7
  // Predicated region
  $region2: #{action_encoder.1} parent=0 // pred_check
    _
  $region3: #{action_encoder.1} parent=0 // pred_check_branch
    %12 = sbr.rel (0) target = $region5
  $region4: #{action_encoder.1} parent=0 // pred_region
    _
  $region5: #{action_encoder.1} parent=0 // pred_fallthru
    _
  // Predicated region
  $region6: #{action_encoder.1} parent=0 // pred_check
    _
  $region7: #{action_encoder.1} parent=0 // pred_check_branch
    %14 = sbr.rel (0) target = $region9
  $region8: #{action_encoder.1} parent=0 // pred_region
    _
  $region9: #{action_encoder.1} parent=0 // pred_fallthru
    _
  // Predicated region
  $region10: #{action_encoder.1} parent=0 // pred_check
    _
  $region11: #{action_encoder.1} parent=0 // pred_check_branch
    %16 = sbr.rel (0) target = $region13
  $region12: #{action_encoder.1} parent=0 // pred_region
    _
  $region13: #{action_encoder.1} parent=0 // pred_fallthru
    _
  // Predicated region
  $region14: #{action_encoder.1} parent=0 // pred_check
    _
  $region15: #{action_encoder.1} parent=0 // pred_check_branch
    %18 = sbr.rel (0) target = $region17
  $region16: #{action_encoder.1} parent=0 // pred_region
    _
  $region17: #{action_encoder.1} parent=0 // pred_fallthru
    _
  // Predicated region
  $region18: #{action_encoder.1} parent=0 // pred_check
    _
  $region19: #{action_encoder.1} parent=0 // pred_check_branch
    %20 = sbr.rel (0) target = $region21
  $region20: #{action_encoder.1} parent=0 // pred_region
    _
  $region21: #{action_encoder.1} parent=0 // pred_fallthru
    _
  // Predicated region
  $region22: #{action_encoder.1} parent=0 // pred_check
    _
  $region23: #{action_encoder.1} parent=0 // pred_check_branch
    %22 = sbr.rel (0) target = $region25
  $region24: #{action_encoder.1} parent=0 // pred_region
    _
  $region25: #{action_encoder.1} parent=0 // pred_fallthru
    _
  %v23 = vld [vmem:[%s0] sm:$0x3]
  %v24 = vld [vmem:[%s1] sm:$0xff]
  %v25 = vld [vmem:[%s1 + $0x8] sm:$0xff]
  %v26 = vld [vmem:[%s1 + $0x10] sm:$0xff]
  %v27 = vld [vmem:[%s1 + $0x18] sm:$0xff]
  %v28 = vld [vmem:[%s1 + $0x20] sm:$0xff]
  %v29 = vld [vmem:[%s1 + $0x28] sm:$0xff]
  %v30 = vld [vmem:[%s1 + $0x30] sm:$0xff]
  %v31 = vld [vmem:[%s1 + $0x38] sm:$0xff]
  %v32 = vld [vmem:[%s2] sm:$0x1]
  %v34 = vperm.slane %v32, 0
  %vm36 = vcmask 523264
  %v38 = vsel %vm36, %v23, 0
  %40 = vmatpush.msra.mxu0 0.0
  %41 = vmatpush.msra.mxu0 0.0
  %42 = vmatpush.msra.mxu0 0.0
  %43 = vmatpush.msra.mxu0 0.0
  %44 = vmatpush.msra.mxu0 0.0
  %45 = vmatpush.msra.mxu0 0.0
  %46 = vmatpush.msra.mxu0 0.0
  %47 = vmatpush.msra.mxu0 0.0
  %48 = vmatpush.msra.mxu0 %v31
  %49 = vmatpush.msra.mxu0 %v30
  %50 = vmatpush.msra.mxu0 %v29
  %51 = vmatpush.msra.mxu0 %v28
  %52 = vmatpush.msra.mxu0 %v27
  %53 = vmatpush.msra.mxu0 %v26
  %54 = vmatpush.msra.mxu0 %v25
  %55 = vmatpush.msra.mxu0 %v24
  %56 = vmatmul.f32.gmra.mxu0 %v38
  %v57 = vpop.f32.mrf.mxu0
  %v58 = vadd.f32 %v34, %v57
  %59 = vdwg.mxu0
  %v60 = vld [vmem:[%s5] sm:$0xff]
  %v61 = vld [vmem:[%s5 + $0x8] sm:$0xff]
  %v62 = vld [vmem:[%s5 + $0x10] sm:$0xff]
  %v63 = vld [vmem:[%s5 + $0x18] sm:$0xff]
  %v64 = vld [vmem:[%s5 + $0x20] sm:$0xff]
  %v65 = vld [vmem:[%s5 + $0x28] sm:$0xff]
  %v66 = vld [vmem:[%s5 + $0x30] sm:$0xff]
  %v67 = vld [vmem:[%s5 + $0x38] sm:$0xff]
  %v68 = vld [vmem:[%s5 + $0x40] sm:$0xff]
  %v69 = vld [vmem:[%s5 + $0x48] sm:$0xff]
  %v70 = vld [vmem:[%s5 + $0x50] sm:$0xff]
  %v71 = vld [vmem:[%s5 + $0x58] sm:$0xff]
  %v72 = vld [vmem:[%s5 + $0x60] sm:$0xff]
  %v73 = vld [vmem:[%s5 + $0x68] sm:$0xff]
  %v74 = vld [vmem:[%s5 + $0x70] sm:$0xff]
  %v75 = vld [vmem:[%s5 + $0x78] sm:$0xff]
  %76 = vmatpush.msra.mxu0 %v75
  %77 = vmatpush.msra.mxu0 %v74
  %78 = vmatpush.msra.mxu0 %v73
  %79 = vmatpush.msra.mxu0 %v72
  %80 = vmatpush.msra.mxu0 %v71
  %81 = vmatpush.msra.mxu0 %v70
  %82 = vmatpush.msra.mxu0 %v69
  %83 = vmatpush.msra.mxu0 %v68
  %84 = vmatpush.msra.mxu0 %v67
  %85 = vmatpush.msra.mxu0 %v66
  %86 = vmatpush.msra.mxu0 %v65
  %87 = vmatpush.msra.mxu0 %v64
  %88 = vmatpush.msra.mxu0 %v63
  %89 = vmatpush.msra.mxu0 %v62
  %90 = vmatpush.msra.mxu0 %v61
  %91 = vmatpush.msra.mxu0 %v60
  %92 = vmatmul.f32.gmra.mxu0 %v58
  %v93 = vpop.f32.mrf.mxu0
  %v94 = vadd.f32 0.0, %v93
  %95 = vdwg.mxu0
  %v96 = vsub.f32 %v58, %v94
  %v97 = vmul.f32 %v96, %v96
  %98 = vmatpush.msra.mxu0 %v75
  %99 = vmatpush.msra.mxu0 %v74
  %100 = vmatpush.msra.mxu0 %v73
  %101 = vmatpush.msra.mxu0 %v72
  %102 = vmatpush.msra.mxu0 %v71
  %103 = vmatpush.msra.mxu0 %v70
  %104 = vmatpush.msra.mxu0 %v69
  %105 = vmatpush.msra.mxu0 %v68
  %106 = vmatpush.msra.mxu0 %v67
  %107 = vmatpush.msra.mxu0 %v66
  %108 = vmatpush.msra.mxu0 %v65
  %109 = vmatpush.msra.mxu0 %v64
  %110 = vmatpush.msra.mxu0 %v63
  %111 = vmatpush.msra.mxu0 %v62
  %112 = vmatpush.msra.mxu0 %v61
  %113 = vmatpush.msra.mxu0 %v60
  %114 = vmatmul.f32.gmra.mxu0 %v97
  %v115 = vpop.f32.mrf.mxu0
  %v116 = vadd.f32 1e-05, %v115
  %117 = vdwg.mxu0
  %v118 = vrsqrt.pop %v116
  %v119 = vmul.f32 %v118, %v116
  %v120 = vmul.f32 %v119, %v118
  %v121 = vmul.f32 0.5, %v120
  %v122 = vsub.f32 1.5, %v121
  %v123 = vmul.f32 %v118, %v122
  %vm124 = vweird.f32 %v116
  %vm125 = vweird.f32 %v118
  %vm126 = vmor %vm124, %vm125
  %v127 = vsel %vm126, %v118, %v123
  %v128 = vmul.f32 %v96, %v127
  %v129 = vld [vmem:[%s3] sm:$0x1]
  %v131 = vperm.slane %v129, 0
  %v133 = vmul.f32 %v128, %v131
  %v134 = vld [vmem:[%s4] sm:$0x1]
  %v136 = vperm.slane %v134, 0
  %v138 = vadd.f32 %v133, %v136
  %v139 = vmax.f32 %v138, 0.0
  %140 = vst [vmem:[%s6] sm:$0x3] %v139
  // Predicated region
  $region26: #{action_encoder.1} parent=0 // pred_check
    _
  $region27: #{action_encoder.1} parent=0 // pred_check_branch
    %142 = sbr.rel (0) target = $region29
  $region28: #{action_encoder.1} parent=0 // pred_region
    _
  $region29: #{action_encoder.1} parent=0 // pred_fallthru
    _
  // Predicated region
  $region30: #{action_encoder.1} parent=0 // pred_check
    _
  $region31: #{action_encoder.1} parent=0 // pred_check_branch
    %144 = sbr.rel (0) target = $region33
  $region32: #{action_encoder.1} parent=0 // pred_region
    _
  $region33: #{action_encoder.1} parent=0 // pred_fallthru
    _

</llo_original>
